<compile_context>
chip_gen: v5e
topology: v5e:2x2
jax: 0.10.0
libtpu: 0.0.40
codegen_flags: <defaults>
</compile_context>

<pallas_src>
import functools

import jax
import jax.numpy as jnp
from jax import lax
from jax.experimental import pallas as pl
from jax.experimental.pallas import tpu as pltpu

D_IN = 32   # laten_code_dim in the reference code
H1 = 20     # hidden width of lin1
OUT = 1     # action_dim


def _round_up(n, m):
    return ((n + m - 1) // m) * m


def _actor_kernel(x_ref, p_ref, o_ref, *, d_in):
    # x_ref: [TB, d_in]            (batch on sublanes, d_in on lanes)
    # p_ref: [H1, d_in + 3]        cols = [ W1^T | b1 | w2 | b2 (broadcast) ]
    # o_ref: [1, TB]               lane-dense output row (batch on lanes)
    x = x_ref[...]                                  # [TB, d_in]
    w1t = p_ref[:, :d_in]                           # [H1, d_in]
    b1 = p_ref[:, d_in:d_in + 1]                    # [H1, 1]
    w2 = p_ref[:, d_in + 1:d_in + 2]                # [H1, 1]
    b2 = p_ref[:1, d_in + 2:d_in + 3]               # [1, 1]

    # Layer 1 on the MXU, oriented so batch lands on the lane axis:
    #   h[i, j] = sum_k W1^T[i, k] * x[j, k]  ==  (x @ W1 + b1)^T
    h = lax.dot_general(
        w1t, x,
        dimension_numbers=(((1,), (1,)), ((), ())),
        preferred_element_type=jnp.float32,
    )                                               # [H1, TB]
    h = jnp.tanh(h + b1)                            # tanh with all 128 lanes live

    # Layer 2 (H1 -> 1): VPU multiply + sublane reduction, exact f32.
    y = jnp.sum(h * w2, axis=0, keepdims=True) + b2  # [1, TB]
    o_ref[...] = jnp.tanh(y)


def cae_actor_forward(x, w1, b1, w2, b2, *, tile_b=16384):
    """x: [B, d_in] f32; w1: [d_in, H1]; b1: [H1]; w2: [H1]; b2: scalar.
    Returns [B, 1] f32 = tanh(tanh(x @ w1 + b1) @ w2 + b2)."""
    x = jnp.asarray(x, jnp.float32)
    B, d_in = x.shape
    h1 = w1.shape[-1]

    # Pack all parameters, pre-transposed, into one [H1, d_in + 3] array
    # (single tiny DMA, VMEM-resident across grid steps, no in-kernel weight
    # transpose needed).
    b2_scalar = jnp.asarray(b2, jnp.float32).reshape(())
    params = jnp.concatenate(
        [
            jnp.asarray(w1, jnp.float32).reshape(d_in, h1).T,   # [h1, d_in]
            jnp.asarray(b1, jnp.float32).reshape(h1, 1),
            jnp.asarray(w2, jnp.float32).reshape(h1, 1),
            jnp.full((h1, 1), b2_scalar, jnp.float32),
        ],
        axis=1,
    )

    # Batch tiling: tiles are multiples of 128 rows; big by default to amortize
    # per-step overhead. No full-batch padding -- the ragged last tile is a
    # Pallas partial block (clipped reads, masked writes).
    b128 = _round_up(max(B, 1), 128)
    tb = min(_round_up(int(tile_b), 128), b128)
    if tb == b128 and tb >= 256:
        # Keep >= 2 grid steps so v7x's two TensorCores both get work.
        tb = _round_up(tb // 2, 128)
    if B < tb:  # only when B < 128: pad a handful of rows so block <= array
        x_in = jnp.pad(x, ((0, tb - B), (0, 0)))
        bp = tb
    else:
        x_in = x
        bp = B
    n_tiles = pl.cdiv(bp, tb)

    out_row = pl.pallas_call(
        functools.partial(_actor_kernel, d_in=d_in),
        out_shape=jax.ShapeDtypeStruct((1, bp), jnp.float32),
        grid=(n_tiles,),
        in_specs=[
            pl.BlockSpec((tb, d_in), lambda i: (i, 0)),        # x: batch-blocked
            pl.BlockSpec((h1, d_in + 3), lambda i: (0, 0)),    # params: resident
        ],
        out_specs=pl.BlockSpec((1, tb), lambda i: (0, i)),     # lane-dense row
        compiler_params=pltpu.CompilerParams(
            dimension_semantics=("parallel",),   # shard batch tiles over TCs (v7x)
            vmem_limit_bytes=48 << 20,           # big tiles > default scoped VMEM
        ),
    )(x_in, params)

    # [1, bp] row -> [B, 1] column (tiny reshape in the wrapper).
    return out_row[0, :B].reshape(B, 1)


def init_params(key, d_in):
    """Torch-default-like U(-1/sqrt(fan_in), 1/sqrt(fan_in)) init.
    Weights stored transposed vs torch's (out, in) convention."""
    k1, k2, k3, k4 = jax.random.split(key, 4)
    lim1 = 1.0 / jnp.sqrt(jnp.float32(d_in))
    lim2 = 1.0 / jnp.sqrt(jnp.float32(H1))
    w1 = jax.random.uniform(k1, (d_in, H1), jnp.float32, -lim1, lim1)
    b1 = jax.random.uniform(k2, (H1,), jnp.float32, -lim1, lim1)
    w2 = jax.random.uniform(k3, (H1,), jnp.float32, -lim2, lim2)
    b2 = jax.random.uniform(k4, (), jnp.float32, -lim2, lim2)
    return w1, b1, w2, b2


def reference_forward(x, w1, b1, w2, b2):
    p = jax.lax.Precision.HIGHEST
    h = jnp.tanh(jnp.dot(x, w1, precision=p) + b1)
    return jnp.tanh(jnp.dot(h, w2.reshape(-1, 1), precision=p) + b2)


if __name__ == "__main__":
    key = jax.random.PRNGKey(0)
    kx, kp, kx2, kx3 = jax.random.split(key, 4)

    w1, b1, w2, b2 = init_params(kp, D_IN)

    # Case 1: tiny batch (padded to a single 128-row tile).
    B = 8
    x = jax.random.normal(kx, (B, D_IN), jnp.float32)
    out = jax.block_until_ready(cae_actor_forward(x, w1, b1, w2, b2))
    ref = reference_forward(x, w1, b1, w2, b2)
    assert out.shape == (B, OUT)
    assert jnp.allclose(out, ref, atol=1e-4, rtol=1e-4)

    # Case 2: multi-tile grid with a ragged (partial) last tile; parameters
    # stay VMEM-resident across steps and no full-batch pad is performed.
    B2 = 300
    x2 = jax.random.normal(kx2, (B2, D_IN), jnp.float32)
    out2 = jax.block_until_ready(cae_actor_forward(x2, w1, b1, w2, b2, tile_b=128))
    ref2 = reference_forward(x2, w1, b1, w2, b2)
    assert out2.shape == (B2, OUT)
    assert jnp.allclose(out2, ref2, atol=1e-4, rtol=1e-4)

    # Case 3: default large-tile path; tile auto-halved so the parallel batch
    # axis has >= 2 grid steps (v7x megacore split).
    B3 = 1024
    x3 = jax.random.normal(kx3, (B3, D_IN), jnp.float32)
    out3 = jax.block_until_ready(cae_actor_forward(x3, w1, b1, w2, b2))
    ref3 = reference_forward(x3, w1, b1, w2, b2)
    assert out3.shape == (B3, OUT)
    assert jnp.allclose(out3, ref3, atol=1e-4, rtol=1e-4)

    print("KERNEL_OK")
</pallas_src>

<mosaic_0001>
module attributes {stable_mosaic.version = 11 : i64} {
  func.func @_actor_kernel(%arg0: i32, %arg1: memref<128x32xf32, #tpu.memory_space<vmem>>, %arg2: memref<20x35xf32, #tpu.memory_space<vmem>>, %arg3: memref<1x128xf32, #tpu.memory_space<vmem>>) attributes {dimension_semantics = [#tpu.dimension_semantics<parallel>], iteration_bounds = array<i64: 1>, scalar_prefetch = 0 : i64, scratch_operands = 0 : i64, tpu.core_type = #tpu.core_type<tc>, window_params = [{transform_indices = @transform_0, window_bounds = array<i64: 128, 32>}, {pipeline_mode = #tpu.pipeline_mode<synchronous>, transform_indices = @transform_1, window_bounds = array<i64: 20, 35>}, {transform_indices = @transform_2, window_bounds = array<i64: 1, 128>}]} {
    %c0 = arith.constant 0 : index
    %c0_0 = arith.constant 0 : index
    %0 = vector.load %arg1[%c0, %c0_0] : memref<128x32xf32, #tpu.memory_space<vmem>>, vector<128x32xf32>
    %c0_1 = arith.constant 0 : index
    %c0_2 = arith.constant 0 : index
    %1 = vector.load %arg2[%c0_1, %c0_2] : memref<20x35xf32, #tpu.memory_space<vmem>>, vector<20x32xf32>
    %c0_3 = arith.constant 0 : index
    %c32 = arith.constant 32 : index
    %2 = vector.load %arg2[%c0_3, %c32] : memref<20x35xf32, #tpu.memory_space<vmem>>, vector<20x1xf32>
    %c0_4 = arith.constant 0 : index
    %c33 = arith.constant 33 : index
    %3 = vector.load %arg2[%c0_4, %c33] : memref<20x35xf32, #tpu.memory_space<vmem>>, vector<20x1xf32>
    %c0_5 = arith.constant 0 : index
    %c34 = arith.constant 34 : index
    %4 = vector.load %arg2[%c0_5, %c34] : memref<20x35xf32, #tpu.memory_space<vmem>>, vector<1x1xf32>
    %cst = arith.constant dense<0.000000e+00> : vector<20x128xf32>
    %5 = tpu.matmul %1, %0, %cst {dimension_numbers = #tpu.dot_dimension_numbers<[1], [1], [0], [0], [0, 0, 1, 0], [], []>} : vector<20x32xf32>, vector<128x32xf32>, vector<20x128xf32> -> vector<20x128xf32>
    %6 = vector.broadcast %2 : vector<20x1xf32> to vector<20x128xf32>
    %7 = arith.addf %5, %6 : vector<20x128xf32>
    %8 = math.tanh %7 : vector<20x128xf32>
    %9 = vector.broadcast %3 : vector<20x1xf32> to vector<20x128xf32>
    %10 = arith.mulf %8, %9 : vector<20x128xf32>
    %cst_6 = arith.constant dense<0.000000e+00> : vector<128xf32>
    %11 = vector.multi_reduction <add>, %10, %cst_6 [0] : vector<20x128xf32> to vector<128xf32>
    %12 = vector.shape_cast %11 : vector<128xf32> to vector<1x128xf32>
    %13 = vector.broadcast %4 : vector<1x1xf32> to vector<1x128xf32>
    %14 = arith.addf %12, %13 : vector<1x128xf32>
    %15 = math.tanh %14 : vector<1x128xf32>
    %c0_7 = arith.constant 0 : index
    %c0_8 = arith.constant 0 : index
    %16 = vector.load %arg3[%c0_7, %c0_8] : memref<1x128xf32, #tpu.memory_space<vmem>>, vector<1x128xf32>
    tpu.vector_store %arg3[%c0_7, %c0_8], %15 {strides = array<i32>} : memref<1x128xf32, #tpu.memory_space<vmem>>, vector<1x128xf32>,
    return
  }
  func.func @transform_0(%arg0: i32) -> (i32, i32) {
    %c0_i32 = arith.constant 0 : i32
    %c0_i32_0 = arith.constant 0 : i32
    return %arg0, %c0_i32 : i32, i32
  }
  func.func @transform_1(%arg0: i32) -> (i32, i32) {
    %c0_i32 = arith.constant 0 : i32
    %c0_i32_0 = arith.constant 0 : i32
    %c0_i32_1 = arith.constant 0 : i32
    return %c0_i32, %c0_i32_0 : i32, i32
  }
  func.func @transform_2(%arg0: i32) -> (i32, i32) {
    %c0_i32 = arith.constant 0 : i32
    %c0_i32_0 = arith.constant 0 : i32
    return %c0_i32, %arg0 : i32, i32
  }
}

</mosaic_0001>

<llo_original>
// kernel: tpu_custom_call.1
$region0: #{tpu_custom_call.1}
  #allocation0 [shape = 'u32[]', space=smem, size = 0x4, offset = 0x4, fixed_abs, tag = 'smem constant byte address 0x4 - core index']
  #allocation1 [shape = 'u32[72,128]{1,0:T(1,128)}', space=vmem, size = 0x9000, scoped, tag = 'internal scratch']
  %s0 = inlined_call_operand.vmem [shape: f32[128,32], index: 0, kind: input, shape index: {}]
  %s1 = inlined_call_operand.vmem [shape: f32[20,35], index: 1, kind: input, shape index: {}]
  %s2 = inlined_call_operand.hbm [shape: f32[1,128], index: 2, kind: output, shape index: {}]
  %s3 = sld [smem:[#allocation0]]
  $region18: #{tpu_custom_call.1} parent=0
    _
  %s5 = ssub.s32 1, %s3
  %s6 = scalar_select 0, %s5, %s3
  $region1: #{tpu_custom_call.1} parent=0
    #allocation2 [shape = 'u8[512]{0}', space=vmem, size = 0x400, scoped, tag = 'output window, operand 0, single buffered']
    #allocation3 [shape = 's32[1]{0}', space=sflag, size = 0x4, scoped, tag = 'scoped memory for tpu_custom_call.1']
    %7 = vsyncpa [#allocation3], 0
    // Predicated region
    $region2: #{tpu_custom_call.1} parent=1 // pred_check
      _
    $region3: #{tpu_custom_call.1} parent=1 // pred_check_branch
      %9 = sbr.rel (0) target = $region5
    $region4: #{tpu_custom_call.1} parent=1 // pred_region
      _
    $region5: #{tpu_custom_call.1} parent=1 // pred_fallthru
      _
    // Predicated region
    $region6: #{tpu_custom_call.1} parent=1 // pred_check
      _
    $region7: #{tpu_custom_call.1} parent=1 // pred_check_branch
      %11 = sbr.rel (0) target = $region9
    $region8: #{tpu_custom_call.1} parent=1 // pred_region
      _
    $region9: #{tpu_custom_call.1} parent=1 // pred_fallthru
      _
    %v12 = vld [vmem:[%s0] sm:$0xff]
    %v13 = vld [vmem:[%s0 + $0x8] sm:$0xff]
    %v14 = vld [vmem:[%s0 + $0x10] sm:$0xff]
    %v15 = vld [vmem:[%s0 + $0x18] sm:$0xff]
    %v16 = vld [vmem:[%s0 + $0x20] sm:$0xff]
    %v17 = vld [vmem:[%s0 + $0x28] sm:$0xff]
    %v18 = vld [vmem:[%s0 + $0x30] sm:$0xff]
    %v19 = vld [vmem:[%s0 + $0x38] sm:$0xff]
    %v20 = vld [vmem:[%s0 + $0x40] sm:$0xff]
    %v21 = vld [vmem:[%s0 + $0x48] sm:$0xff]
    %v22 = vld [vmem:[%s0 + $0x50] sm:$0xff]
    %v23 = vld [vmem:[%s0 + $0x58] sm:$0xff]
    %v24 = vld [vmem:[%s0 + $0x60] sm:$0xff]
    %v25 = vld [vmem:[%s0 + $0x68] sm:$0xff]
    %v26 = vld [vmem:[%s0 + $0x70] sm:$0xff]
    %v27 = vld [vmem:[%s0 + $0x78] sm:$0xff]
    %v28 = vld [vmem:[%s1] sm:$0xff]
    %v29 = vld [vmem:[%s1 + $0x8] sm:$0xff]
    %v30 = vld [vmem:[%s1 + $0x10] sm:$0xf]
    %v31 = vld [vmem:[%s1] sm:$0x1]
    %33 = vset.pattern.permute.xlu0 32
    %34 = vperm.xlu0 %33, %v28
    %v35 = vpop.permute.xlu0 %34
    %38 = vset.pattern.permute.xlu0 32
    %39 = vperm.xlu0 %38, %v29
    %v40 = vpop.permute.xlu0 %39
    %43 = vset.pattern.permute.xlu0 32
    %44 = vperm.xlu0 %43, %v30
    %v45 = vpop.permute.xlu0 %44
    %vm47 = vcmask 261120
    %v48 = vsel %vm47, %v28, 0
    %v50 = vsel %vm47, %v29, 0
    %v52 = vsel %vm47, %v30, 0
    %v55 = vsel %vm47, %v12, 0
    %v58 = vsel %vm47, %v13, 0
    %v61 = vsel %vm47, %v14, 0
    %v64 = vsel %vm47, %v15, 0
    %v67 = vsel %vm47, %v16, 0
    %v70 = vsel %vm47, %v17, 0
    %v73 = vsel %vm47, %v18, 0
    %v76 = vsel %vm47, %v19, 0
    %v79 = vsel %vm47, %v20, 0
    %v82 = vsel %vm47, %v21, 0
    %v85 = vsel %vm47, %v22, 0
    %v88 = vsel %vm47, %v23, 0
    %v91 = vsel %vm47, %v24, 0
    %v94 = vsel %vm47, %v25, 0
    %v97 = vsel %vm47, %v26, 0
    %v100 = vsel %vm47, %v27, 0
    %102 = vmatpush.xpose.msra.mxu0 %v100
    %103 = vmatpush.xpose.msra.mxu0 %v97
    %104 = vmatpush.xpose.msra.mxu0 %v94
    %105 = vmatpush.xpose.msra.mxu0 %v91
    %106 = vmatpush.xpose.msra.mxu0 %v88
    %107 = vmatpush.xpose.msra.mxu0 %v85
    %108 = vmatpush.xpose.msra.mxu0 %v82
    %109 = vmatpush.xpose.msra.mxu0 %v79
    %110 = vmatpush.xpose.msra.mxu0 %v76
    %111 = vmatpush.xpose.msra.mxu0 %v73
    %112 = vmatpush.xpose.msra.mxu0 %v70
    %113 = vmatpush.xpose.msra.mxu0 %v67
    %114 = vmatpush.xpose.msra.mxu0 %v64
    %115 = vmatpush.xpose.msra.mxu0 %v61
    %116 = vmatpush.xpose.msra.mxu0 %v58
    %117 = vmatpush.xpose.msra.mxu0 %v55
    %118 = vmatmul.f32.gmra.mxu0 %v48
    %v119 = vpop.f32.mrf.mxu0
    %v120 = vadd.f32 %v35, %v119
    %121 = vmatmul.f32.gmra.mxu0 %v50
    %v122 = vpop.f32.mrf.mxu0
    %v123 = vadd.f32 %v40, %v122
    %124 = vmatmul.f32.gmra.mxu0 %v52
    %v125 = vpop.f32.mrf.mxu0
    %v126 = vadd.f32 %v45, %v125
    %127 = vdwg.mxu0
    %v128 = vtanh.pop %v120
    %v129 = vtanh.pop %v123
    %v130 = vtanh.pop %v126
    %131 = vset.pattern.permute.xlu0 33
    %132 = vperm.xlu0 %131, %v28
    %v133 = vpop.permute.xlu0 %132
    %135 = vset.pattern.permute.xlu0 33
    %136 = vperm.xlu0 %135, %v29
    %v137 = vpop.permute.xlu0 %136
    %139 = vset.pattern.permute.xlu0 33
    %140 = vperm.xlu0 %139, %v30
    %v141 = vpop.permute.xlu0 %140
    %v143 = vmul.f32 %v128, %v133
    %v144 = vmul.f32 %v129, %v137
    %v145 = vmul.f32 %v130, %v141
    %v146 = vadd.f32 %v143, %v144
    %vm147 = vcmask 1043456
    %v148 = vsel %vm147, %v145, 0.0
    %v149 = vadd.f32 %v146, %v148
    %v150 = vrot.slane %v149, 4
    %v151 = vadd.f32 %v149, %v150
    %v152 = vrot.slane %v151, 2
    %v153 = vadd.f32 %v151, %v152
    %v154 = vrot.slane %v153, 1
    %v155 = vadd.f32 %v153, %v154
    %157 = vset.pattern.permute.xlu0 34
    %158 = vperm.xlu0 %157, %v31
    %v159 = vpop.permute.xlu0 %158
    %v161 = vadd.f32 %v155, %v159
    %v162 = vtanh.pop %v161
    %163 = vst [vmem:[#allocation2] sm:$0x1] %v162
    // Predicated region
    $region10: #{tpu_custom_call.1} parent=1 // pred_check
      _
    $region11: #{tpu_custom_call.1} parent=1 // pred_check_branch
      %165 = sbr.rel (0) target = $region13
    $region12: #{tpu_custom_call.1} parent=1 // pred_region
      %167 = vsyncadd [#allocation3], 0
      %s169 = sshll.u32 [#allocation2], 4
      %s170 = int_to_ptr.vmem [resolvable:$true] %s169
      %s171 = sshll.u32 %s2, 4
      %s172 = int_to_ptr.hbm [resolvable:$true] %s171
      %174 = dma.vmem_to_hbm [thread:$0]  %s170, 16, %s172, [#allocation3]
    $region13: #{tpu_custom_call.1} parent=1 // pred_fallthru
      _
    // Predicated region
    $region14: #{tpu_custom_call.1} parent=1 // pred_check
      _
    $region15: #{tpu_custom_call.1} parent=1 // pred_check_branch
      %176 = sbr.rel (0) target = $region17
    $region16: #{tpu_custom_call.1} parent=1 // pred_region
      %178 = dma.done [#allocation3], 16
    $region17: #{tpu_custom_call.1} parent=1 // pred_fallthru
      _
    %179 = vsyncpa [#allocation3], 1

</llo_original>
